<compile_context>
chip_gen: v7x
topology: tpu7x:2x2x1
jax: 0.10.0
libtpu: 0.0.40
codegen_flags: <defaults>
</compile_context>

<pallas_src>
import jax
import jax.numpy as jnp
from jax.experimental import pallas as pl
from jax.experimental.pallas import tpu as pltpu


def _flat_tile_kernel(x_ref, o_ref):
    # x_ref: (TC, THW) tile of the pre-flattened (C, HW) image (batch squeezed)
    # o_ref: (THW, TC) tile of the (HW, C) output
    o_ref[...] = x_ref[...].T  # single XLU transpose, nothing else in-kernel


def _round_up(a, m):
    return -(-a // m) * m


def _tile_budget_bytes():
    """Per-tile VMEM budget, derived per generation (review items 1/4/5)."""
    try:
        kind = jax.devices()[0].device_kind.lower()
    except Exception:
        kind = ""
    if "v5 lite" in kind or "v5e" in kind or "v5lite" in kind:
        return 3 * 512 * 1024          # ~1.5 MiB tiles on v5e (16 MiB scoped default)
    return 4 * 1024 * 1024             # ~4 MiB tiles on v6e / v7x / default


def _pick_tiles(B, C, HW, itemsize, budget):
    """Choose (tc, thw). Only called when C >= 128 (narrow C uses XLA)."""
    thw_floor = min(128, HW)

    # tc: prefer the full channel dim -> each output tile is a single
    # contiguous HBM write DMA and the C grid axis collapses to one block.
    if C * thw_floor * itemsize <= budget:
        tc = C
    else:
        # Very large C: 128-aligned chunk sized to the budget at thw_floor.
        tc = max(128, ((budget // (thw_floor * itemsize)) // 128) * 128)

    # thw: largest 128-multiple (or the full dim when HW <= 128) keeping the
    # tile inside the budget, capped at one block covering all of HW.
    if HW <= 128:
        thw = HW
    else:
        thw = ((budget // (tc * itemsize)) // 128) * 128
        thw = max(128, min(thw, _round_up(HW, 128)))

        # Keep enough grid steps for megacore sharding / pipeline depth
        # (review: >= ~8 steps); shrink thw before giving up on occupancy.
        def _steps(t):
            return B * (-(-HW // t)) * (-(-C // tc))

        while thw > 128 and _steps(thw) < 8:
            thw = max(128, ((thw // 2) // 128) * 128)

    return tc, thw


def flat_forward(x):
    """x: (B, C, *spatial) -> (B, prod(spatial), C), same dtype."""
    B, C = x.shape[0], x.shape[1]
    HW = 1
    for d in x.shape[2:]:
        HW *= d

    # flatten(2) in the wrapper: free contiguous-trailing-dim collapse in XLA.
    x2 = x.reshape(B, C, HW)

    # Narrow-channel dispatch: with C < 128 the output last dim forces
    # lane-masked partial stores in any Pallas path; plain XLA wins there.
    if C < 128:
        return jnp.transpose(x2, (0, 2, 1))

    itemsize = jnp.dtype(x.dtype).itemsize
    tc, thw = _pick_tiles(B, C, HW, itemsize, _tile_budget_bytes())
    n_c = pl.cdiv(C, tc)
    n_hw = pl.cdiv(HW, thw)

    cost = pl.CostEstimate(
        flops=0,
        transcendentals=0,
        bytes_accessed=2 * B * C * HW * itemsize,
    )

    return pl.pallas_call(
        _flat_tile_kernel,
        out_shape=jax.ShapeDtypeStruct((B, HW, C), x.dtype),
        grid_spec=pltpu.PrefetchScalarGridSpec(
            num_scalar_prefetch=0,
            grid=(B, n_hw, n_c),
            in_specs=[
                # default Buffered(2); with enlarged tiles, depth-2 both sides.
                pl.BlockSpec(
                    (pl.Squeezed(), tc, thw),
                    lambda b, hw, c: (b, c, hw),
                ),
            ],
            out_specs=pl.BlockSpec(
                (pl.Squeezed(), thw, tc),
                lambda b, hw, c: (b, hw, c),
            ),
        ),
        compiler_params=pltpu.CompilerParams(
            dimension_semantics=("parallel", "parallel", "parallel"),
            vmem_limit_bytes=32 * 1024 * 1024,
        ),
        cost_estimate=cost,
    )(x2)


if __name__ == "__main__":
    key = jax.random.PRNGKey(0)
    k_small, k_big, k_edge = jax.random.split(key, 3)

    # Small shape implied by the module spec: B=2, C=4, H=W=16.
    # (C < 128 -> narrow-channel XLA dispatch path.)
    B, C, H, W = 2, 4, 16, 16
    x = jax.random.normal(k_small, (B, C, H, W), dtype=jnp.float32)
    out = jax.block_until_ready(flat_forward(x))
    ref = jnp.transpose(x.reshape(B, C, H * W), (0, 2, 1))
    assert out.shape == (B, H * W, C), out.shape
    assert out.dtype == x.dtype
    assert jnp.array_equal(out, ref), "mismatch vs reference (small shape)"

    # Pallas path: tc == C (full channel), 128-aligned HW tiling, >= 8 steps.
    B2, C2, H2, W2 = 2, 256, 32, 32
    x2 = jax.random.normal(k_big, (B2, C2, H2, W2), dtype=jnp.float32)
    out2 = jax.block_until_ready(flat_forward(x2))
    ref2 = jnp.transpose(x2.reshape(B2, C2, H2 * W2), (0, 2, 1))
    assert out2.shape == (B2, H2 * W2, C2), out2.shape
    assert jnp.array_equal(out2, ref2), "mismatch vs reference (aligned shape)"

    # Pallas path with non-128-multiple C and HW (masked partial edge blocks).
    B3, C3, H3, W3 = 2, 192, 30, 30
    x3 = jax.random.normal(k_edge, (B3, C3, H3, W3), dtype=jnp.float32)
    out3 = jax.block_until_ready(flat_forward(x3))
    ref3 = jnp.transpose(x3.reshape(B3, C3, H3 * W3), (0, 2, 1))
    assert out3.shape == (B3, H3 * W3, C3), out3.shape
    assert jnp.array_equal(out3, ref3), "mismatch vs reference (edge-tile shape)"

    print("KERNEL_OK")
</pallas_src>

<mosaic_0001>
module attributes {stable_mosaic.version = 11 : i64} {
  func.func @_flat_tile_kernel(%arg0: i32, %arg1: i32, %arg2: i32, %arg3: memref<1x256x256xf32, #tpu.memory_space<vmem>>, %arg4: memref<1x256x256xf32, #tpu.memory_space<vmem>>) attributes {dimension_semantics = [#tpu.dimension_semantics<parallel>, #tpu.dimension_semantics<parallel>, #tpu.dimension_semantics<parallel>], iteration_bounds = array<i64: 2, 4, 1>, scalar_prefetch = 0 : i64, scratch_operands = 0 : i64, tpu.core_type = #tpu.core_type<tc>, window_params = [{transform_indices = @transform_0, window_bounds = array<i64: 1, 256, 256>}, {transform_indices = @transform_1, window_bounds = array<i64: 1, 256, 256>}]} {
    %c0 = arith.constant 0 : index
    %c0_0 = arith.constant 0 : index
    %c0_1 = arith.constant 0 : index
    %0 = vector.load %arg3[%c0, %c0_0, %c0_1] : memref<1x256x256xf32, #tpu.memory_space<vmem>>, vector<1x256x256xf32>
    %1 = vector.shape_cast %0 : vector<1x256x256xf32> to vector<256x256xf32>
    %2 = tpu.transpose %1, [1, 0] : vector<256x256xf32> -> vector<256x256xf32>
    %c0_2 = arith.constant 0 : index
    %c0_3 = arith.constant 0 : index
    %c0_4 = arith.constant 0 : index
    %3 = vector.load %arg4[%c0_2, %c0_3, %c0_4] : memref<1x256x256xf32, #tpu.memory_space<vmem>>, vector<1x256x256xf32>
    %4 = vector.shape_cast %3 : vector<1x256x256xf32> to vector<256x256xf32>
    %5 = vector.shape_cast %2 : vector<256x256xf32> to vector<1x256x256xf32>
    tpu.vector_store %arg4[%c0_2, %c0_3, %c0_4], %5 {strides = array<i32>} : memref<1x256x256xf32, #tpu.memory_space<vmem>>, vector<1x256x256xf32>,
    return
  }
  func.func @transform_0(%arg0: i32, %arg1: i32, %arg2: i32) -> (i32, i32, i32) {
    %c0_i32 = arith.constant 0 : i32
    return %arg0, %arg2, %arg1 : i32, i32, i32
  }
  func.func @transform_1(%arg0: i32, %arg1: i32, %arg2: i32) -> (i32, i32, i32) {
    %c0_i32 = arith.constant 0 : i32
    return %arg0, %arg1, %arg2 : i32, i32, i32
  }
}

</mosaic_0001>

<llo_original>
// kernel: tpu_custom_call.1
$region0: #{tpu_custom_call.1}
  #allocation0 [shape = 'u32[]', space=smem, size = 0x4, offset = 0x4, fixed_abs, tag = 'smem constant byte address 0x4 - core index']
  #allocation1 [shape = 'u32[144,128]{1,0:T(1,128)}', space=vmem, size = 0x12000, scoped, tag = 'internal scratch']
  %s0 = inlined_call_operand.hbm [shape: f32[2,256,1024], index: 0, kind: input, shape index: {}]
  %s1 = inlined_call_operand.hbm [shape: f32[2,1024,256], index: 1, kind: output, shape index: {}]
  %s2 = sld [smem:[#allocation0]]
  $region41: #{tpu_custom_call.1} parent=0
    _
  %s4 = ssub.s32 1, %s2
  %s5 = scalar_select 0, %s4, %s2
  $region1: #{tpu_custom_call.1} parent=0
    #allocation2 [shape = 'u8[524288]{0}', space=vmem, size = 0x80000, scoped, tag = 'input window, operand 0']
    #allocation3 [shape = 's32[2]{0}', space=sflag, size = 0x8, scoped, tag = 'scoped memory for tpu_custom_call.1']
    #allocation4 [shape = 's32[2]{0}', space=sflag, size = 0x8, scoped, tag = 'scoped memory for tpu_custom_call.1']
    #allocation5 [shape = 'u8[524288]{0}', space=vmem, size = 0x80000, scoped, tag = 'output window, operand 0']
    %6 = vsyncpa [#allocation3], 0
    %s7 = scalar_lea.sflag [#allocation3], 1
    %8 = vsyncpa %s7, 0
    %9 = vsyncpa [#allocation4], 0
    %s10 = scalar_lea.sflag [#allocation4], 1
    %11 = vsyncpa %s10, 0
    loop: start=0, step=1, limit=10
    $region2: #{tpu_custom_call.1} parent=1 // loop_pre_header
      _
    $region3: #{tpu_custom_call.1} parent=1 // loop_header
      %s13 = sphi 0, %s17
      %p14 = scmp.ge.s32.totalorder %s13, 10
      %s20 = sphi 0, %s39
      %s21 = sphi 0, %s35
      %s22 = sphi 0, %s31
      %s23 = sphi 0, %s20
      %s24 = sphi 0, %s21
      %s25 = sphi 0, %s22
      %s26 = sphi 0, %s23
      %s27 = sphi 0, %s24
      %s28 = sphi 0, %s25
      %s46 = sphi 0, %s48
      %s49 = sphi 0, %s46
      %s50 = sphi 0, %s49
      %s66 = sphi 0, %s50
      %s76 = sphi 0, %s78
      %s79 = sphi 0, %s76
      %s80 = sphi 0, %s79
      %s96 = sphi 0, %s80
    $region4: #{tpu_custom_call.1} parent=1 // loop_header_branch
      %16 = sbr.rel (%p14) target = $region8
    $region5: #{tpu_custom_call.1} parent=1 // loop_body
      %s18 = ssub.s32 %s13, 1
      %s19 = ssub.s32 %s13, 2
      %s29 = sadd.s32 1, %s22
      %p30 = scmp.ge.s32.totalorder %s29, 1
      %s31 = scalar_select %p30, 0, %s29
      %s32 = sadd.s32 1, %s21
      %s33 = scalar_select %p30, %s32, %s21
      %p34 = scmp.ge.s32.totalorder %s33, 4
      %s35 = scalar_select %p34, 0, %s33
      %s36 = sadd.s32 1, %s20
      %s37 = scalar_select %p34, %s36, %s20
      %p38 = scmp.ge.s32.totalorder %s37, 2
      %s39 = scalar_select %p38, 0, %s37
      %s40 = ssub.s32 %s20, %s39
      %s41 = ssub.s32 %s22, %s31
      %s42 = sor.u32 %s40, %s41
      %s43 = ssub.s32 %s21, %s35
      %s44 = sor.u32 %s42, %s43
      %p45 = scmp.eq.s32.totalorder %s44, 0
      %s47 = sadd.s32 %s46, 1
      %s48 = scalar_select %p45, %s46, %s47
      %p51 = pneg %p45
      %p52 = scmp.eq.s32.totalorder %s13, 7
      %p53 = por %p51, %p52
      %p54 = scmp.ne.s32.totalorder %s46, %s49
      %p55 = scmp.eq.s32.totalorder %s13, 0
      %p56 = por %p54, %p55
      %p57 = scmp.ne.s32.totalorder %s46, %s49
      %p58 = scmp.eq.s32.totalorder %s18, 7
      %p59 = por %p57, %p58
      %p60 = scmp.ne.s32.totalorder %s49, %s50
      %p61 = scmp.eq.s32.totalorder %s18, 0
      %p62 = por %p60, %p61
      %p63 = scmp.ne.s32.totalorder %s49, %s50
      %p64 = scmp.eq.s32.totalorder %s19, 7
      %p65 = por %p63, %p64
      %p67 = scmp.ne.s32.totalorder %s50, %s66
      %p68 = scmp.eq.s32.totalorder %s19, 0
      %p69 = por %p67, %p68
      %s70 = ssub.s32 %s20, %s39
      %s71 = ssub.s32 %s21, %s35
      %s72 = sor.u32 %s70, %s71
      %s73 = ssub.s32 %s22, %s31
      %s74 = sor.u32 %s72, %s73
      %p75 = scmp.eq.s32.totalorder %s74, 0
      %s77 = sadd.s32 %s76, 1
      %s78 = scalar_select %p75, %s76, %s77
      %p81 = pneg %p75
      %p82 = scmp.eq.s32.totalorder %s13, 7
      %p83 = por %p81, %p82
      %p84 = scmp.ne.s32.totalorder %s76, %s79
      %p85 = scmp.eq.s32.totalorder %s13, 0
      %p86 = por %p84, %p85
      %p87 = scmp.ne.s32.totalorder %s76, %s79
      %p88 = scmp.eq.s32.totalorder %s18, 7
      %p89 = por %p87, %p88
      %p90 = scmp.ne.s32.totalorder %s79, %s80
      %p91 = scmp.eq.s32.totalorder %s18, 0
      %p92 = por %p90, %p91
      %p93 = scmp.ne.s32.totalorder %s79, %s80
      %p94 = scmp.eq.s32.totalorder %s19, 7
      %p95 = por %p93, %p94
      %p97 = scmp.ne.s32.totalorder %s80, %s96
      %p98 = scmp.eq.s32.totalorder %s19, 0
      %p99 = por %p97, %p98
      %p100 = scmp.le.s32.totalorder 1, %s13
      %p101 = scmp.lt.s32.totalorder %s13, 9
      %p102 = pnand %p100, %p101
      %p103 = pneg %p102
      // Predicated region
      $region9: #{tpu_custom_call.1} parent=5 // pred_check
        _
      $region10: #{tpu_custom_call.1} parent=5 // pred_check_branch
        %105 = sbr.rel (%p102) target = $region12
      $region11: #{tpu_custom_call.1} parent=5 // pred_region
        %s106 = ssub.s32 %s13, 1
      $region12: #{tpu_custom_call.1} parent=5 // pred_fallthru
        _
      %p107 = scmp.lt.s32.totalorder %s13, 8
      // Predicated region
      $region13: #{tpu_custom_call.1} parent=5 // pred_check
        %p108 = pneg %p107
      $region14: #{tpu_custom_call.1} parent=5 // pred_check_branch
        %110 = sbr.rel (%p108) target = $region16
      $region15: #{tpu_custom_call.1} parent=5 // pred_region
        // Predicated region
        $region17: #{tpu_custom_call.1} parent=15 // pred_check
          %p111 = pneg %p56
        $region18: #{tpu_custom_call.1} parent=15 // pred_check_branch
          %113 = sbr.rel (%p111) target = $region20
        $region19: #{tpu_custom_call.1} parent=15 // pred_region
          %s114 = sand.u32 %s46, 1
          %s115 = scalar_lea.sflag [#allocation3], %s114
          %s116 = sand.u32 %s46, 1
          %s117 = smul.addr %s116, 512
          %s118 = scalar_lea.vmem [#allocation2], %s117
          %s119 = smul.u32 32, %s22
          %s120 = smul.u32 2, %s21
          %s122 = ssub.s32 8192, 8192
          %123 = vsyncadd %s115, %s122
          %s124 = smul.addr %s119, 8
          %s125 = sadd.s32 %s120, %s124
          %s126 = smul.addr %s20, 256
          %s127 = sadd.s32 %s125, %s126
          %s128 = smul.addr %s127, 128
          %s129 = scalar_lea.hbm %s0, %s128
          %s130 = sshll.u32 %s118, 4
          %s131 = int_to_ptr.vmem [resolvable:$true] %s130
          %136 = dma.hbm_to_vmem [thread:$0]  %s129, 8192, %s131, %s115, 1024, 256, 16
        $region20: #{tpu_custom_call.1} parent=15 // pred_fallthru
          _
      $region16: #{tpu_custom_call.1} parent=5 // pred_fallthru
        _
      %p137 = scmp.le.s32.totalorder 1, %s13
      %p138 = scmp.lt.s32.totalorder %s13, 9
      %p139 = pnand %p137, %p138
      %p140 = pneg %p139
      // Predicated region
      $region21: #{tpu_custom_call.1} parent=5 // pred_check
        _
      $region22: #{tpu_custom_call.1} parent=5 // pred_check_branch
        %142 = sbr.rel (%p139) target = $region24
      $region23: #{tpu_custom_call.1} parent=5 // pred_region
        %s143 = ssub.s32 %s13, 1
        %s144 = sand.u32 %s49, 1
        %s145 = scalar_lea.sflag [#allocation3], %s144
        %s146 = sand.u32 %s49, 1
        %s147 = smul.addr %s146, 512
        %s148 = scalar_lea.vmem [#allocation2], %s147
        // Predicated region
        $region25: #{tpu_custom_call.1} parent=23 // pred_check
          %p149 = pneg %p62
        $region26: #{tpu_custom_call.1} parent=23 // pred_check_branch
          %151 = sbr.rel (%p149) target = $region28
        $region27: #{tpu_custom_call.1} parent=23 // pred_region
          %152 = dma.done %s145, 8192
        $region28: #{tpu_custom_call.1} parent=23 // pred_fallthru
          _
        %s153 = sand.u32 %s49, 1
        %s154 = scalar_lea.sflag [#allocation3], %s153
        %s155 = sand.u32 %s49, 1
        %s156 = smul.addr %s155, 512
        %s157 = scalar_lea.vmem [#allocation2], %s156
        %p158 = pneg %p62
        %p159 = pneg %p59
        %p160 = pneg %p92
        %p161 = pneg %p89
        %s162 = sand.u32 %s79, 1
        %s163 = scalar_lea.sflag [#allocation4], %s162
        %s164 = sand.u32 %s79, 1
        %s165 = smul.addr %s164, 512
        %s166 = scalar_lea.vmem [#allocation5], %s165
        %s167 = smul.u32 32, %s25
        %s168 = smul.u32 2, %s24
        %s169 = smul.u32 32, %s24
        %s170 = smul.u32 2, %s25
        %v171 = vld [vmem:[%s148] sm:$0xff]
        %v172 = vld [vmem:[%s148 + $0x8] sm:$0xff]
        %v173 = vld [vmem:[%s148 + $0x10] sm:$0xff]
        %v174 = vld [vmem:[%s148 + $0x18] sm:$0xff]
        %v175 = vld [vmem:[%s148 + $0x20] sm:$0xff]
        %v176 = vld [vmem:[%s148 + $0x28] sm:$0xff]
        %v177 = vld [vmem:[%s148 + $0x30] sm:$0xff]
        %v178 = vld [vmem:[%s148 + $0x38] sm:$0xff]
        %v179 = vld [vmem:[%s148 + $0x40] sm:$0xff]
        %v180 = vld [vmem:[%s148 + $0x48] sm:$0xff]
        %v181 = vld [vmem:[%s148 + $0x50] sm:$0xff]
        %v182 = vld [vmem:[%s148 + $0x58] sm:$0xff]
        %v183 = vld [vmem:[%s148 + $0x60] sm:$0xff]
        %v184 = vld [vmem:[%s148 + $0x68] sm:$0xff]
        %v185 = vld [vmem:[%s148 + $0x70] sm:$0xff]
        %v186 = vld [vmem:[%s148 + $0x78] sm:$0xff]
        %v187 = vld [vmem:[%s148 + $0x80] sm:$0xff]
        %v188 = vld [vmem:[%s148 + $0x88] sm:$0xff]
        %v189 = vld [vmem:[%s148 + $0x90] sm:$0xff]
        %v190 = vld [vmem:[%s148 + $0x98] sm:$0xff]
        %v191 = vld [vmem:[%s148 + $0xa0] sm:$0xff]
        %v192 = vld [vmem:[%s148 + $0xa8] sm:$0xff]
        %v193 = vld [vmem:[%s148 + $0xb0] sm:$0xff]
        %v194 = vld [vmem:[%s148 + $0xb8] sm:$0xff]
        %v195 = vld [vmem:[%s148 + $0xc0] sm:$0xff]
        %v196 = vld [vmem:[%s148 + $0xc8] sm:$0xff]
        %v197 = vld [vmem:[%s148 + $0xd0] sm:$0xff]
        %v198 = vld [vmem:[%s148 + $0xd8] sm:$0xff]
        %v199 = vld [vmem:[%s148 + $0xe0] sm:$0xff]
        %v200 = vld [vmem:[%s148 + $0xe8] sm:$0xff]
        %v201 = vld [vmem:[%s148 + $0xf0] sm:$0xff]
        %v202 = vld [vmem:[%s148 + $0xf8] sm:$0xff]
        %v203 = vld [vmem:[%s148 + $0x100] sm:$0xff]
        %v204 = vld [vmem:[%s148 + $0x108] sm:$0xff]
        %v205 = vld [vmem:[%s148 + $0x110] sm:$0xff]
        %v206 = vld [vmem:[%s148 + $0x118] sm:$0xff]
        %v207 = vld [vmem:[%s148 + $0x120] sm:$0xff]
        %v208 = vld [vmem:[%s148 + $0x128] sm:$0xff]
        %v209 = vld [vmem:[%s148 + $0x130] sm:$0xff]
        %v210 = vld [vmem:[%s148 + $0x138] sm:$0xff]
        %v211 = vld [vmem:[%s148 + $0x140] sm:$0xff]
        %v212 = vld [vmem:[%s148 + $0x148] sm:$0xff]
        %v213 = vld [vmem:[%s148 + $0x150] sm:$0xff]
        %v214 = vld [vmem:[%s148 + $0x158] sm:$0xff]
        %v215 = vld [vmem:[%s148 + $0x160] sm:$0xff]
        %v216 = vld [vmem:[%s148 + $0x168] sm:$0xff]
        %v217 = vld [vmem:[%s148 + $0x170] sm:$0xff]
        %v218 = vld [vmem:[%s148 + $0x178] sm:$0xff]
        %v219 = vld [vmem:[%s148 + $0x180] sm:$0xff]
        %v220 = vld [vmem:[%s148 + $0x188] sm:$0xff]
        %v221 = vld [vmem:[%s148 + $0x190] sm:$0xff]
        %v222 = vld [vmem:[%s148 + $0x198] sm:$0xff]
        %v223 = vld [vmem:[%s148 + $0x1a0] sm:$0xff]
        %v224 = vld [vmem:[%s148 + $0x1a8] sm:$0xff]
        %v225 = vld [vmem:[%s148 + $0x1b0] sm:$0xff]
        %v226 = vld [vmem:[%s148 + $0x1b8] sm:$0xff]
        %v227 = vld [vmem:[%s148 + $0x1c0] sm:$0xff]
        %v228 = vld [vmem:[%s148 + $0x1c8] sm:$0xff]
        %v229 = vld [vmem:[%s148 + $0x1d0] sm:$0xff]
        %v230 = vld [vmem:[%s148 + $0x1d8] sm:$0xff]
        %v231 = vld [vmem:[%s148 + $0x1e0] sm:$0xff]
        %v232 = vld [vmem:[%s148 + $0x1e8] sm:$0xff]
        %v233 = vld [vmem:[%s148 + $0x1f0] sm:$0xff]
        %v234 = vld [vmem:[%s148 + $0x1f8] sm:$0xff]
        %235 = vxpose.xlu0.b32.start [1/16] %v171, 128
        %236 = vxpose.xlu0.b32.cont [2/16] %v173, 128
        %237 = vxpose.xlu0.b32.cont [3/16] %v175, 128
        %238 = vxpose.xlu0.b32.cont [4/16] %v177, 128
        %239 = vxpose.xlu0.b32.cont [5/16] %v179, 128
        %240 = vxpose.xlu0.b32.cont [6/16] %v181, 128
        %241 = vxpose.xlu0.b32.cont [7/16] %v183, 128
        %242 = vxpose.xlu0.b32.cont [8/16] %v185, 128
        %243 = vxpose.xlu0.b32.cont [9/16] %v187, 128
        %244 = vxpose.xlu0.b32.cont [10/16] %v189, 128
        %245 = vxpose.xlu0.b32.cont [11/16] %v191, 128
        %246 = vxpose.xlu0.b32.cont [12/16] %v193, 128
        %247 = vxpose.xlu0.b32.cont [13/16] %v195, 128
        %248 = vxpose.xlu0.b32.cont [14/16] %v197, 128
        %249 = vxpose.xlu0.b32.cont [15/16] %v199, 128
        %250 = vxpose.xlu0.b32.end [16/16] %v201, 128
        %v251 = vpop.trf.xlu0
        %v252 = vpop.trf.xlu0
        %v253 = vpop.trf.xlu0
        %v254 = vpop.trf.xlu0
        %v255 = vpop.trf.xlu0
        %v256 = vpop.trf.xlu0
        %v257 = vpop.trf.xlu0
        %v258 = vpop.trf.xlu0
        %v259 = vpop.trf.xlu0
        %v260 = vpop.trf.xlu0
        %v261 = vpop.trf.xlu0
        %v262 = vpop.trf.xlu0
        %v263 = vpop.trf.xlu0
        %v264 = vpop.trf.xlu0
        %v265 = vpop.trf.xlu0
        %v266 = vpop.trf.xlu0
        %267 = vxpose.xlu0.b32.start [1/16] %v172, 128
        %268 = vxpose.xlu0.b32.cont [2/16] %v174, 128
        %269 = vxpose.xlu0.b32.cont [3/16] %v176, 128
        %270 = vxpose.xlu0.b32.cont [4/16] %v178, 128
        %271 = vxpose.xlu0.b32.cont [5/16] %v180, 128
        %272 = vxpose.xlu0.b32.cont [6/16] %v182, 128
        %273 = vxpose.xlu0.b32.cont [7/16] %v184, 128
        %274 = vxpose.xlu0.b32.cont [8/16] %v186, 128
        %275 = vxpose.xlu0.b32.cont [9/16] %v188, 128
        %276 = vxpose.xlu0.b32.cont [10/16] %v190, 128
        %277 = vxpose.xlu0.b32.cont [11/16] %v192, 128
        %278 = vxpose.xlu0.b32.cont [12/16] %v194, 128
        %279 = vxpose.xlu0.b32.cont [13/16] %v196, 128
        %280 = vxpose.xlu0.b32.cont [14/16] %v198, 128
        %281 = vxpose.xlu0.b32.cont [15/16] %v200, 128
        %282 = vxpose.xlu0.b32.end [16/16] %v202, 128
        %v283 = vpop.trf.xlu0
        %v284 = vpop.trf.xlu0
        %v285 = vpop.trf.xlu0
        %v286 = vpop.trf.xlu0
        %v287 = vpop.trf.xlu0
        %v288 = vpop.trf.xlu0
        %v289 = vpop.trf.xlu0
        %v290 = vpop.trf.xlu0
        %v291 = vpop.trf.xlu0
        %v292 = vpop.trf.xlu0
        %v293 = vpop.trf.xlu0
        %v294 = vpop.trf.xlu0
        %v295 = vpop.trf.xlu0
        %v296 = vpop.trf.xlu0
        %v297 = vpop.trf.xlu0
        %v298 = vpop.trf.xlu0
        %299 = vxpose.xlu0.b32.start [1/16] %v203, 128
        %300 = vxpose.xlu0.b32.cont [2/16] %v205, 128
        %301 = vxpose.xlu0.b32.cont [3/16] %v207, 128
        %302 = vxpose.xlu0.b32.cont [4/16] %v209, 128
        %303 = vxpose.xlu0.b32.cont [5/16] %v211, 128
        %304 = vxpose.xlu0.b32.cont [6/16] %v213, 128
        %305 = vxpose.xlu0.b32.cont [7/16] %v215, 128
        %306 = vxpose.xlu0.b32.cont [8/16] %v217, 128
        %307 = vxpose.xlu0.b32.cont [9/16] %v219, 128
        %308 = vxpose.xlu0.b32.cont [10/16] %v221, 128
        %309 = vxpose.xlu0.b32.cont [11/16] %v223, 128
        %310 = vxpose.xlu0.b32.cont [12/16] %v225, 128
        %311 = vxpose.xlu0.b32.cont [13/16] %v227, 128
        %312 = vxpose.xlu0.b32.cont [14/16] %v229, 128
        %313 = vxpose.xlu0.b32.cont [15/16] %v231, 128
        %314 = vxpose.xlu0.b32.end [16/16] %v233, 128
        %v315 = vpop.trf.xlu0
        %v316 = vpop.trf.xlu0
        %v317 = vpop.trf.xlu0
        %v318 = vpop.trf.xlu0
        %v319 = vpop.trf.xlu0
        %v320 = vpop.trf.xlu0
        %v321 = vpop.trf.xlu0
        %v322 = vpop.trf.xlu0
        %v323 = vpop.trf.xlu0
        %v324 = vpop.trf.xlu0
        %v325 = vpop.trf.xlu0
        %v326 = vpop.trf.xlu0
        %v327 = vpop.trf.xlu0
        %v328 = vpop.trf.xlu0
        %v329 = vpop.trf.xlu0
        %v330 = vpop.trf.xlu0
        %331 = vxpose.xlu0.b32.start [1/16] %v204, 128
        %332 = vxpose.xlu0.b32.cont [2/16] %v206, 128
        %333 = vxpose.xlu0.b32.cont [3/16] %v208, 128
        %334 = vxpose.xlu0.b32.cont [4/16] %v210, 128
        %335 = vxpose.xlu0.b32.cont [5/16] %v212, 128
        %336 = vxpose.xlu0.b32.cont [6/16] %v214, 128
        %337 = vxpose.xlu0.b32.cont [7/16] %v216, 128
        %338 = vxpose.xlu0.b32.cont [8/16] %v218, 128
        %339 = vxpose.xlu0.b32.cont [9/16] %v220, 128
        %340 = vxpose.xlu0.b32.cont [10/16] %v222, 128
        %341 = vxpose.xlu0.b32.cont [11/16] %v224, 128
        %342 = vxpose.xlu0.b32.cont [12/16] %v226, 128
        %343 = vxpose.xlu0.b32.cont [13/16] %v228, 128
        %344 = vxpose.xlu0.b32.cont [14/16] %v230, 128
        %345 = vxpose.xlu0.b32.cont [15/16] %v232, 128
        %346 = vxpose.xlu0.b32.end [16/16] %v234, 128
        %v347 = vpop.trf.xlu0
        %v348 = vpop.trf.xlu0
        %v349 = vpop.trf.xlu0
        %v350 = vpop.trf.xlu0
        %v351 = vpop.trf.xlu0
        %v352 = vpop.trf.xlu0
        %v353 = vpop.trf.xlu0
        %v354 = vpop.trf.xlu0
        %v355 = vpop.trf.xlu0
        %v356 = vpop.trf.xlu0
        %v357 = vpop.trf.xlu0
        %v358 = vpop.trf.xlu0
        %v359 = vpop.trf.xlu0
        %v360 = vpop.trf.xlu0
        %v361 = vpop.trf.xlu0
        %v362 = vpop.trf.xlu0
        %363 = vst [vmem:[%s166] sm:$0xff] %v251
        %364 = vst [vmem:[%s166 + $0x8] sm:$0xff] %v315
        %365 = vst [vmem:[%s166 + $0x10] sm:$0xff] %v252
        %366 = vst [vmem:[%s166 + $0x18] sm:$0xff] %v316
        %367 = vst [vmem:[%s166 + $0x20] sm:$0xff] %v253
        %368 = vst [vmem:[%s166 + $0x28] sm:$0xff] %v317
        %369 = vst [vmem:[%s166 + $0x30] sm:$0xff] %v254
        %370 = vst [vmem:[%s166 + $0x38] sm:$0xff] %v318
        %371 = vst [vmem:[%s166 + $0x40] sm:$0xff] %v255
        %372 = vst [vmem:[%s166 + $0x48] sm:$0xff] %v319
        %373 = vst [vmem:[%s166 + $0x50] sm:$0xff] %v256
        %374 = vst [vmem:[%s166 + $0x58] sm:$0xff] %v320
        %375 = vst [vmem:[%s166 + $0x60] sm:$0xff] %v257
        %376 = vst [vmem:[%s166 + $0x68] sm:$0xff] %v321
        %377 = vst [vmem:[%s166 + $0x70] sm:$0xff] %v258
        %378 = vst [vmem:[%s166 + $0x78] sm:$0xff] %v322
        %379 = vst [vmem:[%s166 + $0x80] sm:$0xff] %v259
        %380 = vst [vmem:[%s166 + $0x88] sm:$0xff] %v323
        %381 = vst [vmem:[%s166 + $0x90] sm:$0xff] %v260
        %382 = vst [vmem:[%s166 + $0x98] sm:$0xff] %v324
        %383 = vst [vmem:[%s166 + $0xa0] sm:$0xff] %v261
        %384 = vst [vmem:[%s166 + $0xa8] sm:$0xff] %v325
        %385 = vst [vmem:[%s166 + $0xb0] sm:$0xff] %v262
        %386 = vst [vmem:[%s166 + $0xb8] sm:$0xff] %v326
        %387 = vst [vmem:[%s166 + $0xc0] sm:$0xff] %v263
        %388 = vst [vmem:[%s166 + $0xc8] sm:$0xff] %v327
        %389 = vst [vmem:[%s166 + $0xd0] sm:$0xff] %v264
        %390 = vst [vmem:[%s166 + $0xd8] sm:$0xff] %v328
        %391 = vst [vmem:[%s166 + $0xe0] sm:$0xff] %v265
        %392 = vst [vmem:[%s166 + $0xe8] sm:$0xff] %v329
        %393 = vst [vmem:[%s166 + $0xf0] sm:$0xff] %v266
        %394 = vst [vmem:[%s166 + $0xf8] sm:$0xff] %v330
        %395 = vst [vmem:[%s166 + $0x100] sm:$0xff] %v283
        %396 = vst [vmem:[%s166 + $0x108] sm:$0xff] %v347
        %397 = vst [vmem:[%s166 + $0x110] sm:$0xff] %v284
        %398 = vst [vmem:[%s166 + $0x118] sm:$0xff] %v348
        %399 = vst [vmem:[%s166 + $0x120] sm:$0xff] %v285
        %400 = vst [vmem:[%s166 + $0x128] sm:$0xff] %v349
        %401 = vst [vmem:[%s166 + $0x130] sm:$0xff] %v286
        %402 = vst [vmem:[%s166 + $0x138] sm:$0xff] %v350
        %403 = vst [vmem:[%s166 + $0x140] sm:$0xff] %v287
        %404 = vst [vmem:[%s166 + $0x148] sm:$0xff] %v351
        %405 = vst [vmem:[%s166 + $0x150] sm:$0xff] %v288
        %406 = vst [vmem:[%s166 + $0x158] sm:$0xff] %v352
        %407 = vst [vmem:[%s166 + $0x160] sm:$0xff] %v289
        %408 = vst [vmem:[%s166 + $0x168] sm:$0xff] %v353
        %409 = vst [vmem:[%s166 + $0x170] sm:$0xff] %v290
        %410 = vst [vmem:[%s166 + $0x178] sm:$0xff] %v354
        %411 = vst [vmem:[%s166 + $0x180] sm:$0xff] %v291
        %412 = vst [vmem:[%s166 + $0x188] sm:$0xff] %v355
        %413 = vst [vmem:[%s166 + $0x190] sm:$0xff] %v292
        %414 = vst [vmem:[%s166 + $0x198] sm:$0xff] %v356
        %415 = vst [vmem:[%s166 + $0x1a0] sm:$0xff] %v293
        %416 = vst [vmem:[%s166 + $0x1a8] sm:$0xff] %v357
        %417 = vst [vmem:[%s166 + $0x1b0] sm:$0xff] %v294
        %418 = vst [vmem:[%s166 + $0x1b8] sm:$0xff] %v358
        %419 = vst [vmem:[%s166 + $0x1c0] sm:$0xff] %v295
        %420 = vst [vmem:[%s166 + $0x1c8] sm:$0xff] %v359
        %421 = vst [vmem:[%s166 + $0x1d0] sm:$0xff] %v296
        %422 = vst [vmem:[%s166 + $0x1d8] sm:$0xff] %v360
        %423 = vst [vmem:[%s166 + $0x1e0] sm:$0xff] %v297
        %424 = vst [vmem:[%s166 + $0x1e8] sm:$0xff] %v361
        %425 = vst [vmem:[%s166 + $0x1f0] sm:$0xff] %v298
        %426 = vst [vmem:[%s166 + $0x1f8] sm:$0xff] %v362
        %s427 = sand.u32 %s79, 1
        %s428 = scalar_lea.sflag [#allocation4], %s427
        %s429 = sand.u32 %s79, 1
        %s430 = smul.addr %s429, 512
        %s431 = scalar_lea.vmem [#allocation5], %s430
        // Predicated region
        $region29: #{tpu_custom_call.1} parent=23 // pred_check
          %p432 = pneg %p89
        $region30: #{tpu_custom_call.1} parent=23 // pred_check_branch
          %434 = sbr.rel (%p432) target = $region32
        $region31: #{tpu_custom_call.1} parent=23 // pred_region
          %s435 = smul.u32 32, %s24
          %s436 = smul.u32 2, %s25
          %s438 = ssub.s32 8192, 8192
          %439 = vsyncadd %s428, %s438
          %s440 = smul.addr %s435, 2
          %s441 = sadd.s32 %s436, %s440
          %s442 = smul.addr %s23, 256
          %s443 = sadd.s32 %s441, %s442
          %s444 = smul.addr %s443, 128
          %s445 = scalar_lea.hbm %s1, %s444
          %s446 = sshll.u32 %s431, 4
          %s447 = int_to_ptr.vmem [resolvable:$true] %s446
          %452 = dma.vmem_to_hbm [thread:$0]  %s447, 8192, %s445, %s428, 256, 256, 16
        $region32: #{tpu_custom_call.1} parent=23 // pred_fallthru
          _
      $region24: #{tpu_custom_call.1} parent=5 // pred_fallthru
        _
      %p453 = scmp.le.s32.totalorder 2, %s13
      // Predicated region
      $region33: #{tpu_custom_call.1} parent=5 // pred_check
        %p454 = pneg %p453
      $region34: #{tpu_custom_call.1} parent=5 // pred_check_branch
        %456 = sbr.rel (%p454) target = $region36
      $region35: #{tpu_custom_call.1} parent=5 // pred_region
        %s457 = ssub.s32 %s13, 2
        // Predicated region
        $region37: #{tpu_custom_call.1} parent=35 // pred_check
          %p458 = pneg %p95
        $region38: #{tpu_custom_call.1} parent=35 // pred_check_branch
          %460 = sbr.rel (%p458) target = $region40
        $region39: #{tpu_custom_call.1} parent=35 // pred_region
          %s461 = sand.u32 %s80, 1
          %s462 = scalar_lea.sflag [#allocation4], %s461
          %s463 = sand.u32 %s80, 1
          %s464 = smul.addr %s463, 512
          %s465 = scalar_lea.vmem [#allocation5], %s464
          %466 = dma.done %s462, 8192
        $region40: #{tpu_custom_call.1} parent=35 // pred_fallthru
          _
      $region36: #{tpu_custom_call.1} parent=5 // pred_fallthru
        _
    $region6: #{tpu_custom_call.1} parent=1 // loop_footer
      %s17 = sadd.s32 1, %s13
    $region7: #{tpu_custom_call.1} parent=1 // loop_footer_branch
      %12 = sbr.rel target = $region3
    $region8: #{tpu_custom_call.1} parent=1 // loop_exit
      _
    %467 = vsyncpa [#allocation3], 1
    %s468 = scalar_lea.sflag [#allocation3], 1
    %469 = vsyncpa %s468, 1
    %470 = vsyncpa [#allocation4], 1
    %s471 = scalar_lea.sflag [#allocation4], 1
    %472 = vsyncpa %s471, 1

</llo_original>
